<compile_context>
chip_gen: v6e
topology: v6e:2x2x1
jax: 0.10.0
libtpu: 0.0.40
codegen_flags: <defaults>
</compile_context>

<pallas_src>
import functools

import jax
import jax.numpy as jnp
from jax import lax
from jax.experimental import pallas as pl
from jax.experimental.pallas import tpu as pltpu


# ---------------------------------------------------------------------------
# Stage 1: GX = X_flat @ W_ih^T + (b_ih + b_hh)   (one big matmul, row-tiled)
# ---------------------------------------------------------------------------
def input_proj_kernel(x_ref, w_ref, b_ref, gx_ref):
    gx_ref[...] = (jnp.dot(x_ref[...], w_ref[...],
                           preferred_element_type=jnp.float32)
                   + b_ref[...]).astype(gx_ref.dtype)


def _row_tile(rows):
    # Full array when small (always a legal block); otherwise a lane/sublane-friendly tile.
    return rows if rows <= 512 else 256


def input_projection(x_flat, wih_t, bias):
    rows, d_in = x_flat.shape
    g4 = wih_t.shape[1]
    rt = _row_tile(rows)
    return pl.pallas_call(
        input_proj_kernel,
        out_shape=jax.ShapeDtypeStruct((rows, g4), jnp.float32),
        grid_spec=pltpu.PrefetchScalarGridSpec(
            num_scalar_prefetch=0,
            grid=(pl.cdiv(rows, rt),),
            in_specs=[pl.BlockSpec((rt, d_in), lambda i: (i, 0)),
                      pl.BlockSpec((d_in, g4), lambda i: (0, 0)),
                      pl.BlockSpec((1, g4), lambda i: (0, 0))],
            out_specs=pl.BlockSpec((rt, g4), lambda i: (i, 0)),
        ),
        compiler_params=pltpu.CompilerParams(
            dimension_semantics=("parallel",)),
    )(x_flat, wih_t, bias)


# ---------------------------------------------------------------------------
# Stage 2: serial LSTM recurrence over streamed GX chunks + FC epilogue
# ---------------------------------------------------------------------------
def lstm_recurrence_kernel(gx_ref, whh_ref, wfc_ref, bfc_ref, out_ref,
                           h_sc, c_sc, *, hidden, t_chunk):
    H = hidden
    s = pl.program_id(1)

    @pl.when(s == 0)
    def _():
        h_sc[...] = jnp.zeros_like(h_sc)
        c_sc[...] = jnp.zeros_like(c_sc)

    whh = whh_ref[...]  # hoisted out of the time loop (loaded once per chunk)

    def step(t, carry):
        # bias is already folded into gx (stage 1); one matmul per timestep.
        gates = gx_ref[t] + jnp.dot(h_sc[...], whh,
                                    preferred_element_type=jnp.float32)
        # gate columns were pre-permuted to (i, f, o, g):
        #   one sigmoid over the contiguous 3H block, one tanh over the last H.
        sig = jax.nn.sigmoid(gates[:, 0:3 * H])
        i_g = sig[:, 0 * H:1 * H]
        f_g = sig[:, 1 * H:2 * H]
        o_g = sig[:, 2 * H:3 * H]
        g_g = jnp.tanh(gates[:, 3 * H:4 * H])
        c_new = f_g * c_sc[...] + i_g * g_g
        h_sc[...] = o_g * jnp.tanh(c_new)
        c_sc[...] = c_new
        return carry

    lax.fori_loop(0, t_chunk, step, 0, unroll=True)

    # fc on the last hidden state (== output[:, -1, :] of the LSTM)
    @pl.when(s == pl.num_programs(1) - 1)
    def _():
        out_ref[...] = (jnp.dot(h_sc[...], wfc_ref[...],
                                preferred_element_type=jnp.float32)
                        + bfc_ref[...]).astype(out_ref.dtype)


# ---------------------------------------------------------------------------
# Wrapper
# ---------------------------------------------------------------------------
def _time_chunk(T, max_chunk=16):
    for c in range(min(T, max_chunk), 0, -1):
        if T % c == 0:
            return c
    return 1


def _batch_tile(B):
    # Split the batch across megacore TensorCores (v7x) when large enough.
    if B >= 16 and B % 16 == 0:
        return B // 2
    return B


def text_encoder_forward(x, params):
    """x: (B, T, D_in) float32 (batch_first, like the PyTorch module)."""
    B, T, D_in = x.shape
    H = params["whh_t"].shape[0]
    O = params["wfc_t"].shape[1]
    G4 = 4 * H

    # One-time parameter prep: permute PyTorch gate blocks (i,f,g,o) -> (i,f,o,g)
    # so sigmoid / tanh each act on one contiguous lane range, and fold both biases.
    perm = jnp.concatenate([jnp.arange(0, 2 * H),
                            jnp.arange(3 * H, 4 * H),
                            jnp.arange(2 * H, 3 * H)])
    wih_t = params["wih_t"][:, perm]
    whh_t = params["whh_t"][:, perm]
    bias = (params["b_ih"] + params["b_hh"])[perm].reshape(1, G4)

    # Stage 1: hoisted input projection as one large matmul (time-major rows).
    x_tm = jnp.transpose(x, (1, 0, 2))                       # (T, B, D_in)
    gx = input_projection(x_tm.reshape(T * B, D_in), wih_t, bias)
    gx = gx.reshape(T, B, G4)

    tc = _time_chunk(T)
    bb = _batch_tile(B)
    n_s = T // tc
    n_b = pl.cdiv(B, bb)

    # Explicit VMEM budget (double-buffered gx stream + resident weights + scratch),
    # with headroom; keeps v7x's smaller physical VMEM explicit.
    f32 = 4
    est = (2 * tc * bb * G4 + 2 * H * G4 + 2 * H * O + 2 * bb * O
           + 2 * bb * H + G4 + O) * f32
    vmem_limit = int(min(96 * 1024 * 1024, max(32 * 1024 * 1024, 2 * est)))

    kernel = functools.partial(lstm_recurrence_kernel, hidden=H, t_chunk=tc)

    out = pl.pallas_call(
        kernel,
        out_shape=jax.ShapeDtypeStruct((B, O), jnp.float32),
        grid_spec=pltpu.PrefetchScalarGridSpec(
            num_scalar_prefetch=0,
            grid=(n_b, n_s),
            in_specs=[
                pl.BlockSpec((tc, bb, G4), lambda b, s: (s, b, 0)),   # streamed GX
                pl.BlockSpec((H, G4), lambda b, s: (0, 0)),           # W_hh^T (resident)
                pl.BlockSpec((H, O), lambda b, s: (0, 0)),            # W_fc^T (resident)
                pl.BlockSpec((1, O), lambda b, s: (0, 0)),            # b_fc
            ],
            out_specs=pl.BlockSpec((bb, O), lambda b, s: (b, 0)),
            scratch_shapes=[pltpu.VMEM((bb, H), jnp.float32),         # h
                            pltpu.VMEM((bb, H), jnp.float32)],        # c
        ),
        compiler_params=pltpu.CompilerParams(
            dimension_semantics=("parallel", "arbitrary"),
            vmem_limit_bytes=vmem_limit),
    )(gx, whh_t, params["wfc_t"], params["bfc"].reshape(1, O))
    return out


# ---------------------------------------------------------------------------
# Params + pure-JAX reference (PyTorch gate order i,f,g,o)
# ---------------------------------------------------------------------------
def init_params(key, input_size, hidden_size, output_size):
    ks = jax.random.split(key, 6)
    s_lstm = 1.0 / jnp.sqrt(hidden_size)
    s_fc = 1.0 / jnp.sqrt(hidden_size)
    # Stored already transposed for the kernel: (D_in, 4H), (H, 4H), (H, O).
    return {
        "wih_t": jax.random.uniform(ks[0], (input_size, 4 * hidden_size),
                                    jnp.float32, -s_lstm, s_lstm),
        "whh_t": jax.random.uniform(ks[1], (hidden_size, 4 * hidden_size),
                                    jnp.float32, -s_lstm, s_lstm),
        "b_ih": jax.random.uniform(ks[2], (4 * hidden_size,),
                                   jnp.float32, -s_lstm, s_lstm),
        "b_hh": jax.random.uniform(ks[3], (4 * hidden_size,),
                                   jnp.float32, -s_lstm, s_lstm),
        "wfc_t": jax.random.uniform(ks[4], (hidden_size, output_size),
                                    jnp.float32, -s_fc, s_fc),
        "bfc": jax.random.uniform(ks[5], (output_size,),
                                  jnp.float32, -s_fc, s_fc),
    }


def reference_forward(x, params):
    """Pure-JAX reference matching torch.nn.LSTM (gate order i,f,g,o) + Linear."""
    B, T, D_in = x.shape
    H = params["whh_t"].shape[0]
    bias = params["b_ih"] + params["b_hh"]

    def step(carry, x_t):
        h, c = carry
        gates = x_t @ params["wih_t"] + h @ params["whh_t"] + bias
        i_g = jax.nn.sigmoid(gates[:, 0 * H:1 * H])
        f_g = jax.nn.sigmoid(gates[:, 1 * H:2 * H])
        g_g = jnp.tanh(gates[:, 2 * H:3 * H])
        o_g = jax.nn.sigmoid(gates[:, 3 * H:4 * H])
        c = f_g * c + i_g * g_g
        h = o_g * jnp.tanh(c)
        return (h, c), None

    h0 = jnp.zeros((B, H), jnp.float32)
    c0 = jnp.zeros((B, H), jnp.float32)
    (h_T, _), _ = lax.scan(step, (h0, c0), jnp.transpose(x, (1, 0, 2)))
    return h_T @ params["wfc_t"] + params["bfc"]


if __name__ == "__main__":
    B, T = 2, 8
    input_size, hidden_size, output_size = 16, 32, 16

    key = jax.random.PRNGKey(0)
    k_x, k_p = jax.random.split(key)
    x = jax.random.normal(k_x, (B, T, input_size), jnp.float32)
    params = init_params(k_p, input_size, hidden_size, output_size)

    out = text_encoder_forward(x, params)
    out = jax.block_until_ready(out)

    ref = reference_forward(x, params)
    assert out.shape == (B, output_size)
    assert jnp.allclose(out, ref, atol=1e-5, rtol=1e-5), "mismatch vs reference"
    print("KERNEL_OK")
</pallas_src>

<mosaic_0001>
module attributes {stable_mosaic.version = 11 : i64} {
  func.func @input_proj_kernel(%arg0: i32, %arg1: memref<16x16xf32, #tpu.memory_space<vmem>>, %arg2: memref<16x128xf32, #tpu.memory_space<vmem>>, %arg3: memref<1x128xf32, #tpu.memory_space<vmem>>, %arg4: memref<16x128xf32, #tpu.memory_space<vmem>>) attributes {dimension_semantics = [#tpu.dimension_semantics<parallel>], iteration_bounds = array<i64: 1>, scalar_prefetch = 0 : i64, scratch_operands = 0 : i64, tpu.core_type = #tpu.core_type<tc>, window_params = [{transform_indices = @transform_0, window_bounds = array<i64: 16, 16>}, {pipeline_mode = #tpu.pipeline_mode<synchronous>, transform_indices = @transform_1, window_bounds = array<i64: 16, 128>}, {pipeline_mode = #tpu.pipeline_mode<synchronous>, transform_indices = @transform_2, window_bounds = array<i64: 1, 128>}, {transform_indices = @transform_3, window_bounds = array<i64: 16, 128>}]} {
    %c0 = arith.constant 0 : index
    %c0_0 = arith.constant 0 : index
    %0 = vector.load %arg1[%c0, %c0_0] : memref<16x16xf32, #tpu.memory_space<vmem>>, vector<16x16xf32>
    %c0_1 = arith.constant 0 : index
    %c0_2 = arith.constant 0 : index
    %1 = vector.load %arg2[%c0_1, %c0_2] : memref<16x128xf32, #tpu.memory_space<vmem>>, vector<16x128xf32>
    %cst = arith.constant dense<0.000000e+00> : vector<16x128xf32>
    %2 = tpu.matmul %0, %1, %cst {dimension_numbers = #tpu.dot_dimension_numbers<[1], [0], [0], [1], [0, 0, 1, 1], [], []>} : vector<16x16xf32>, vector<16x128xf32>, vector<16x128xf32> -> vector<16x128xf32>
    %c0_3 = arith.constant 0 : index
    %c0_4 = arith.constant 0 : index
    %3 = vector.load %arg3[%c0_3, %c0_4] : memref<1x128xf32, #tpu.memory_space<vmem>>, vector<1x128xf32>
    %4 = vector.broadcast %3 : vector<1x128xf32> to vector<16x128xf32>
    %5 = arith.addf %2, %4 : vector<16x128xf32>
    %c0_5 = arith.constant 0 : index
    %c0_6 = arith.constant 0 : index
    %6 = vector.load %arg4[%c0_5, %c0_6] : memref<16x128xf32, #tpu.memory_space<vmem>>, vector<16x128xf32>
    tpu.vector_store %arg4[%c0_5, %c0_6], %5 {strides = array<i32>} : memref<16x128xf32, #tpu.memory_space<vmem>>, vector<16x128xf32>,
    return
  }
  func.func @transform_0(%arg0: i32) -> (i32, i32) {
    %c0_i32 = arith.constant 0 : i32
    %c0_i32_0 = arith.constant 0 : i32
    return %arg0, %c0_i32 : i32, i32
  }
  func.func @transform_1(%arg0: i32) -> (i32, i32) {
    %c0_i32 = arith.constant 0 : i32
    %c0_i32_0 = arith.constant 0 : i32
    %c0_i32_1 = arith.constant 0 : i32
    return %c0_i32, %c0_i32_0 : i32, i32
  }
  func.func @transform_2(%arg0: i32) -> (i32, i32) {
    %c0_i32 = arith.constant 0 : i32
    %c0_i32_0 = arith.constant 0 : i32
    %c0_i32_1 = arith.constant 0 : i32
    return %c0_i32, %c0_i32_0 : i32, i32
  }
  func.func @transform_3(%arg0: i32) -> (i32, i32) {
    %c0_i32 = arith.constant 0 : i32
    %c0_i32_0 = arith.constant 0 : i32
    return %arg0, %c0_i32 : i32, i32
  }
}

</mosaic_0001>

<llo_original>
// kernel: tpu_custom_call.1
$region0: #{tpu_custom_call.1}
  #allocation0 [shape = 'u32[]', space=smem, size = 0x4, offset = 0x4, fixed_abs, tag = 'smem constant byte address 0x4 - core index']
  #allocation1 [shape = 'u32[144,128]{1,0:T(1,128)}', space=vmem, size = 0x12000, scoped, tag = 'internal scratch']
  %s0 = inlined_call_operand.hbm [shape: f32[16,16], index: 0, kind: input, shape index: {}]
  %s1 = inlined_call_operand.hbm [shape: f32[16,128], index: 1, kind: input, shape index: {}]
  %s2 = inlined_call_operand.vmem [shape: f32[1,128], index: 2, kind: input, shape index: {}]
  %s3 = inlined_call_operand.hbm [shape: f32[16,128], index: 3, kind: output, shape index: {}]
  %s4 = sld [smem:[#allocation0]]
  $region30: #{tpu_custom_call.1} parent=0
    _
  %s6 = ssub.s32 1, %s4
  %s7 = scalar_select 0, %s6, %s4
  $region1: #{tpu_custom_call.1} parent=0
    #allocation2 [shape = 'u8[8192]{0}', space=vmem, size = 0x2000, scoped, tag = 'input window, operand 0, single buffered']
    #allocation3 [shape = 's32[1]{0}', space=sflag, size = 0x4, scoped, tag = 'scoped memory for tpu_custom_call.1']
    #allocation4 [shape = 's32[1]{0}', space=sflag, size = 0x4, scoped, tag = 'scoped memory for tpu_custom_call.1']
    #allocation5 [shape = 'u8[8192]{0}', space=vmem, size = 0x2000, scoped, tag = 'input window, operand 1, single buffered']
    #allocation6 [shape = 's32[1]{0}', space=sflag, size = 0x4, scoped, tag = 'scoped memory for tpu_custom_call.1']
    #allocation7 [shape = 'u8[8192]{0}', space=vmem, size = 0x2000, scoped, tag = 'output window, operand 0, single buffered']
    %8 = vsyncpa [#allocation3], 0
    %9 = vsyncpa [#allocation6], 0
    %10 = vsyncpa [#allocation4], 0
    // Predicated region
    $region2: #{tpu_custom_call.1} parent=1 // pred_check
      _
    $region3: #{tpu_custom_call.1} parent=1 // pred_check_branch
      %12 = sbr.rel (0) target = $region5
    $region4: #{tpu_custom_call.1} parent=1 // pred_region
      %s14 = ssub.s32 256, 256
      %15 = vsyncadd [#allocation3], %s14
      %s16 = sshll.u32 [#allocation2], 4
      %s17 = int_to_ptr.vmem [resolvable:$true] %s16
      %22 = dma.hbm_to_vmem [thread:$0]  %s0, 256, %s17, [#allocation3], 128, 128, 8
    $region5: #{tpu_custom_call.1} parent=1 // pred_fallthru
      _
    // Predicated region
    $region6: #{tpu_custom_call.1} parent=1 // pred_check
      _
    $region7: #{tpu_custom_call.1} parent=1 // pred_check_branch
      %24 = sbr.rel (0) target = $region9
    $region8: #{tpu_custom_call.1} parent=1 // pred_region
      %s26 = ssub.s32 256, 256
      %27 = vsyncadd [#allocation6], %s26
      %s28 = sshll.u32 [#allocation5], 4
      %s29 = int_to_ptr.vmem [resolvable:$true] %s28
      %34 = dma.hbm_to_vmem [thread:$0]  %s1, 256, %s29, [#allocation6], 128, 128, 8
    $region9: #{tpu_custom_call.1} parent=1 // pred_fallthru
      _
    // Predicated region
    $region10: #{tpu_custom_call.1} parent=1 // pred_check
      _
    $region11: #{tpu_custom_call.1} parent=1 // pred_check_branch
      %36 = sbr.rel (0) target = $region13
    $region12: #{tpu_custom_call.1} parent=1 // pred_region
      _
    $region13: #{tpu_custom_call.1} parent=1 // pred_fallthru
      _
    // Predicated region
    $region14: #{tpu_custom_call.1} parent=1 // pred_check
      _
    $region15: #{tpu_custom_call.1} parent=1 // pred_check_branch
      %38 = sbr.rel (0) target = $region17
    $region16: #{tpu_custom_call.1} parent=1 // pred_region
      %39 = dma.done [#allocation3], 256
    $region17: #{tpu_custom_call.1} parent=1 // pred_fallthru
      _
    // Predicated region
    $region18: #{tpu_custom_call.1} parent=1 // pred_check
      _
    $region19: #{tpu_custom_call.1} parent=1 // pred_check_branch
      %41 = sbr.rel (0) target = $region21
    $region20: #{tpu_custom_call.1} parent=1 // pred_region
      %42 = dma.done [#allocation6], 256
    $region21: #{tpu_custom_call.1} parent=1 // pred_fallthru
      _
    %v43 = vld [vmem:[#allocation2] sm:$0xff]
    %v44 = vld [vmem:[#allocation2 + $0x8] sm:$0xff]
    %v45 = vld [vmem:[#allocation5] sm:$0xff]
    %v46 = vld [vmem:[#allocation5 + $0x8] sm:$0xff]
    %v47 = vld [vmem:[%s2] sm:$0x1]
    %v49 = vlaneseq
    %v50 = vshrl.u32 %v49, 7
    %v51 = vsub.s32 0, %v50
    %v52 = vrot.slane %v47, %v51
    %vm54 = vcmask 130048
    %v56 = vsel %vm54, %v43, 0
    %v59 = vsel %vm54, %v44, 0
    %61 = vmatprep.subr.mxu0 0.0
    %62 = vmatpush1.msra.mxu0 0.0
    %63 = vmatprep.subr.mxu0 0.0
    %64 = vmatpush1.msra.mxu0 0.0
    %65 = vmatprep.subr.mxu0 0.0
    %66 = vmatpush1.msra.mxu0 0.0
    %67 = vmatprep.subr.mxu0 0.0
    %68 = vmatpush1.msra.mxu0 0.0
    %69 = vmatprep.subr.mxu0 0.0
    %70 = vmatpush1.msra.mxu0 0.0
    %71 = vmatprep.subr.mxu0 0.0
    %72 = vmatpush1.msra.mxu0 0.0
    %73 = vmatprep.subr.mxu0 0.0
    %74 = vmatpush1.msra.mxu0 0.0
    %75 = vmatprep.subr.mxu0 0.0
    %76 = vmatpush1.msra.mxu0 0.0
    %77 = vmatprep.subr.mxu0 0.0
    %78 = vmatpush1.msra.mxu0 0.0
    %79 = vmatprep.subr.mxu0 0.0
    %80 = vmatpush1.msra.mxu0 0.0
    %81 = vmatprep.subr.mxu0 0.0
    %82 = vmatpush1.msra.mxu0 0.0
    %83 = vmatprep.subr.mxu0 0.0
    %84 = vmatpush1.msra.mxu0 0.0
    %85 = vmatprep.subr.mxu0 0.0
    %86 = vmatpush1.msra.mxu0 0.0
    %87 = vmatprep.subr.mxu0 0.0
    %88 = vmatpush1.msra.mxu0 0.0
    %89 = vmatprep.subr.mxu0 0.0
    %90 = vmatpush1.msra.mxu0 %v46
    %91 = vmatprep.subr.mxu0 0.0
    %92 = vmatpush1.msra.mxu0 %v45
    %93 = vmatprep.subr.mxu0 0.0
    %94 = vmatpush2.msra.mxu0 0.0
    %95 = vmatprep.subr.mxu0 0.0
    %96 = vmatpush2.msra.mxu0 0.0
    %97 = vmatprep.subr.mxu0 0.0
    %98 = vmatpush2.msra.mxu0 0.0
    %99 = vmatprep.subr.mxu0 0.0
    %100 = vmatpush2.msra.mxu0 0.0
    %101 = vmatprep.subr.mxu0 0.0
    %102 = vmatpush2.msra.mxu0 0.0
    %103 = vmatprep.subr.mxu0 0.0
    %104 = vmatpush2.msra.mxu0 0.0
    %105 = vmatprep.subr.mxu0 0.0
    %106 = vmatpush2.msra.mxu0 0.0
    %107 = vmatprep.subr.mxu0 0.0
    %108 = vmatpush2.msra.mxu0 0.0
    %109 = vmatprep.subr.mxu0 0.0
    %110 = vmatpush2.msra.mxu0 0.0
    %111 = vmatprep.subr.mxu0 0.0
    %112 = vmatpush2.msra.mxu0 0.0
    %113 = vmatprep.subr.mxu0 0.0
    %114 = vmatpush2.msra.mxu0 0.0
    %115 = vmatprep.subr.mxu0 0.0
    %116 = vmatpush2.msra.mxu0 0.0
    %117 = vmatprep.subr.mxu0 0.0
    %118 = vmatpush2.msra.mxu0 0.0
    %119 = vmatprep.subr.mxu0 0.0
    %120 = vmatpush2.msra.mxu0 0.0
    %121 = vmatprep.subr.mxu0 0.0
    %122 = vmatpush2.msra.mxu0 0.0
    %123 = vmatprep.subr.mxu0 0.0
    %124 = vmatpush2.msra.mxu0 0.0
    %125 = vmatprep.mubr.f32.mxu0 0.0
    %126 = vmatmul.mubr.f32.gmra.mxu0 %v56
    %v127 = vpop.f32.mrf.mxu0
    %v128 = vadd.f32 %v52, %v127
    %v129 = vpop.f32.mrf.mxu0
    %130 = vmatprep.mubr.f32.mxu0 0.0
    %131 = vmatmul.mubr.f32.gmra.mxu0 %v59
    %v132 = vpop.f32.mrf.mxu0
    %v133 = vadd.f32 %v52, %v132
    %v134 = vpop.f32.mrf.mxu0
    %135 = vdwg.mxu0
    %136 = vst [vmem:[#allocation7] sm:$0xff] %v128
    %137 = vst [vmem:[#allocation7 + $0x8] sm:$0xff] %v133
    // Predicated region
    $region22: #{tpu_custom_call.1} parent=1 // pred_check
      _
    $region23: #{tpu_custom_call.1} parent=1 // pred_check_branch
      %139 = sbr.rel (0) target = $region25
    $region24: #{tpu_custom_call.1} parent=1 // pred_region
      %s141 = ssub.s32 256, 256
      %142 = vsyncadd [#allocation4], %s141
      %s143 = sshll.u32 [#allocation7], 4
      %s144 = int_to_ptr.vmem [resolvable:$true] %s143
      %149 = dma.vmem_to_hbm [thread:$0]  %s144, 256, %s3, [#allocation4], 128, 128, 8
    $region25: #{tpu_custom_call.1} parent=1 // pred_fallthru
      _
    // Predicated region
    $region26: #{tpu_custom_call.1} parent=1 // pred_check
      _
    $region27: #{tpu_custom_call.1} parent=1 // pred_check_branch
      %151 = sbr.rel (0) target = $region29
    $region28: #{tpu_custom_call.1} parent=1 // pred_region
      %152 = dma.done [#allocation4], 256
    $region29: #{tpu_custom_call.1} parent=1 // pred_fallthru
      _
    %153 = vsyncpa [#allocation3], 1
    %154 = vsyncpa [#allocation6], 1
    %155 = vsyncpa [#allocation4], 1

</llo_original>
